<compile_context>
chip_gen: v6e
topology: v6e:2x2x1
jax: 0.10.0
libtpu: 0.0.40
codegen_flags: <defaults>
</compile_context>

<pallas_src>
from functools import partial

import jax
import jax.numpy as jnp
import numpy as np
from jax import lax
from jax.experimental import pallas as pl
from jax.experimental.pallas import tpu as pltpu


def _cdiv(a, b):
    return -(-a // b)


def _hybrid_loss_kernel(nvalid_ref,            # SMEM scalar prefetch, [1] int32
                        vec_ref,               # [8, TB] f32: pred/label/viol rows
                        ent_ref,               # [4, TB, D] gathered entity rows
                        rel_ref,               # [2, TB, D] gathered relation rows
                        out_ref,               # [1, 8, 128] f32 per-core partial
                        bce_acc, viol_acc, rank_acc,
                        *, margin, alpha, beta, gamma):
    j = pl.program_id(1)
    tb = vec_ref.shape[1]
    base = (pl.program_id(0) * pl.num_programs(1) + j) * tb
    n = nvalid_ref[0]                          # valid batch size (SMEM scalar)

    @pl.when(j == 0)
    def _init():
        bce_acc[...] = jnp.zeros_like(bce_acc)
        viol_acc[...] = jnp.zeros_like(viol_acc)
        rank_acc[...] = jnp.zeros_like(rank_acc)

    # ---- BCE + semantic-violation path: batch on lanes ----------------------
    vec = vec_ref[...]                         # [8, TB] f32
    p = vec[0:1, :]                            # predicted probabilities
    y = vec[1:2, :]                            # labels (float)
    viol = vec[2:4, :]                         # violation flags (pos / neg)

    col = lax.broadcasted_iota(jnp.int32, (1, tb), 1) + base
    lmask = (col < n).astype(jnp.float32)

    # nn.BCELoss (mean); PyTorch clamps each log term at -100.  Both logs are
    # kept so soft labels keep exact semantics.
    log_p = jnp.maximum(jnp.log(p), -100.0)
    log_1mp = jnp.maximum(jnp.log(1.0 - p), -100.0)
    bce_terms = -(y * log_p + (1.0 - y) * log_1mp)          # [1, TB]
    bce_acc[...] += lmask * bce_terms                        # elementwise acc
    viol_acc[...] += lmask * viol                            # elementwise acc

    # ---- DistMult margin-ranking path: batch on sublanes, D on lanes --------
    # Cast on load (slabs arrive in native/bf16 dtype; accumulate in f32).
    ph = ent_ref[0].astype(jnp.float32)        # [TB, D]
    pt = ent_ref[1].astype(jnp.float32)
    nh = ent_ref[2].astype(jnp.float32)
    nt = ent_ref[3].astype(jnp.float32)
    pr = rel_ref[0].astype(jnp.float32)
    nr = rel_ref[1].astype(jnp.float32)

    pos_s = jnp.sum(ph * pr * pt, axis=-1, keepdims=True)   # [TB, 1]
    neg_s = jnp.sum(nh * nr * nt, axis=-1, keepdims=True)   # [TB, 1]
    # nn.MarginRankingLoss with target=+1: mean(max(0, margin - (pos - neg)))
    hinge = jnp.maximum(margin - (pos_s - neg_s), 0.0)       # [TB, 1]

    row = lax.broadcasted_iota(jnp.int32, (tb, 1), 0) + base
    smask = (row < n).astype(jnp.float32)
    rank_acc[...] += jnp.sum(smask * hinge, keepdims=True)   # (1,1)

    @pl.when(j == pl.num_programs(1) - 1)
    def _finalize():
        inv_n = 1.0 / n.astype(jnp.float32)
        total = (alpha * jnp.sum(bce_acc[...])
                 + beta * rank_acc[0, 0]
                 + gamma * 0.5 * jnp.sum(viol_acc[...])) * inv_n
        out_ref[...] = jnp.broadcast_to(total, out_ref.shape)


def hybrid_loss_with_semantics(pred_probs, true_labels,
                               entity_emb, relation_emb,
                               pos_triples, neg_triples,
                               rel_domain, rel_range, entity_types,
                               margin=1.0, alpha=1.0, beta=1.0, gamma=1.0,
                               num_cores=2):
    """JAX wrapper mirroring HybridLossWithSemantics.forward.

    RDF constraints are encoded numerically: rel_domain/rel_range hold the
    required type id per relation (-1 = unconstrained) and entity_types is a
    {0,1} [num_entities, num_types] membership matrix.  Embeddings may be
    bf16 (recommended) or f32; the kernel casts to f32 on load.
    """
    B = pos_triples.shape[0]
    D = entity_emb.shape[1]
    if relation_emb.dtype != entity_emb.dtype:
        relation_emb = relation_emb.astype(entity_emb.dtype)
    itemsize = jnp.dtype(entity_emb.dtype).itemsize
    NC = int(num_cores)                       # 2 TCs on v7x; harmless on v5e/v6e

    # ---- batch tiling: D/dtype-aware block size ------------------------------
    # Double-buffered inputs ~= 2 * (6*TB*D*itemsize + 8*TB*4) bytes.  Budget
    # 14 MiB per buffer (<=28 MiB live) which fits under the explicit 48 MiB
    # scoped-VMEM limit on every generation (v5e/v6e: 128 MiB physical,
    # v7x: 64 MiB physical).  TB must be a multiple of 128 (lane dim of the
    # [8,Bp] vec tile / sublane dim of the slab tiles).
    per_row_bytes = 6 * D * itemsize + 8 * 4
    tb_budget = int((14 * 1024 * 1024) // per_row_bytes)
    tb_need = _cdiv(_cdiv(B, NC), 128) * 128          # don't over-block tiny B
    TB = max(128, min(2048, tb_budget, tb_need))
    TB = (TB // 128) * 128
    n_inner = _cdiv(B, NC * TB)
    Bp = NC * n_inner * TB

    ph_i, pr_i, pt_i = pos_triples[:, 0], pos_triples[:, 1], pos_triples[:, 2]
    nh_i, nr_i, nt_i = neg_triples[:, 0], neg_triples[:, 1], neg_triples[:, 2]

    # One gather per table into role-stacked slabs, kept in native dtype.
    # (Not merged into a single [Bp,6,D] slab: that would need an extra
    # concatenate, i.e. a full extra HBM round-trip of the 6*B*D slab, to save
    # one DMA descriptor per step -- a net loss on this memory-bound kernel.)
    ent_idx = jnp.stack([ph_i, pt_i, nh_i, nt_i], axis=0)      # [4, B]
    rel_idx = jnp.stack([pr_i, nr_i], axis=0)                  # [2, B]
    ent_pack = jnp.take(entity_emb, ent_idx, axis=0)           # [4, B, D]
    rel_pack = jnp.take(relation_emb, rel_idx, axis=0)         # [2, B, D]

    # Violation flags (tiny integer gathers; stay in the XLA wrapper).
    def violation_flags(h, r, t):
        d = rel_domain[r]
        rg = rel_range[r]
        h_has = entity_types[h, jnp.maximum(d, 0)] > 0
        t_has = entity_types[t, jnp.maximum(rg, 0)] > 0
        return ((d >= 0) & ~h_has) | ((rg >= 0) & ~t_has)

    viol_pos = violation_flags(ph_i, pr_i, pt_i).astype(jnp.float32)
    viol_neg = violation_flags(nh_i, nr_i, nt_i).astype(jnp.float32)

    # Clip to [0,1]: identity for valid probabilities (PyTorch BCELoss asserts
    # on out-of-range inputs), avoids NaN from fp drift.
    pred = jnp.clip(pred_probs.reshape(-1).astype(jnp.float32), 0.0, 1.0)
    lbl = true_labels.reshape(-1).astype(jnp.float32)

    # Pack pred/label/viol_pos/viol_neg into one sublane-padded [8, Bp] tile.
    # Padding columns get p=0.5 so the logs stay finite (masked in-kernel).
    vec_pack = jnp.zeros((8, Bp), jnp.float32).at[0, :].set(0.5)
    vec_pack = (vec_pack.at[0, :B].set(pred)
                        .at[1, :B].set(lbl)
                        .at[2, :B].set(viol_pos)
                        .at[3, :B].set(viol_neg))

    if Bp > B:
        ent_pack = jnp.pad(ent_pack, ((0, 0), (0, Bp - B), (0, 0)))
        rel_pack = jnp.pad(rel_pack, ((0, 0), (0, Bp - B), (0, 0)))

    nvalid = jnp.array([B], dtype=jnp.int32)          # SMEM scalar prefetch

    kernel = partial(_hybrid_loss_kernel, margin=float(margin),
                     alpha=float(alpha), beta=float(beta), gamma=float(gamma))

    blk = lambda c, j, nref: (0, c * n_inner + j)
    blk3 = lambda c, j, nref: (0, c * n_inner + j, 0)

    out = pl.pallas_call(
        kernel,
        out_shape=jax.ShapeDtypeStruct((NC, 8, 128), jnp.float32),
        grid_spec=pltpu.PrefetchScalarGridSpec(
            num_scalar_prefetch=1,
            grid=(NC, n_inner),
            in_specs=[
                pl.BlockSpec((8, TB), blk),          # packed pred/label/viol
                pl.BlockSpec((4, TB, D), blk3),      # entity rows (native dtype)
                pl.BlockSpec((2, TB, D), blk3),      # relation rows (native dtype)
            ],
            out_specs=pl.BlockSpec((1, 8, 128), lambda c, j, nref: (c, 0, 0)),
            scratch_shapes=[
                pltpu.VMEM((1, TB), jnp.float32),    # bce partial sums
                pltpu.VMEM((2, TB), jnp.float32),    # violation partial sums
                pltpu.VMEM((1, 1), jnp.float32),     # hinge partial sum
            ],
        ),
        compiler_params=pltpu.CompilerParams(
            dimension_semantics=("parallel", "arbitrary"),
            vmem_limit_bytes=48 * 1024 * 1024),
    )(nvalid, vec_pack, ent_pack, rel_pack)

    # Sum the per-core partial losses (linear in the per-core sums).
    return out[:, 0, 0].sum()


def reference_loss(pred_probs, true_labels,
                   entity_emb, relation_emb,
                   pos_triples, neg_triples,
                   rel_domain, rel_range, entity_types,
                   margin=1.0, alpha=1.0, beta=1.0, gamma=1.0):
    p = pred_probs.reshape(-1).astype(jnp.float32)
    y = true_labels.reshape(-1).astype(jnp.float32)
    log_p = jnp.maximum(jnp.log(p), -100.0)
    log_1mp = jnp.maximum(jnp.log(1.0 - p), -100.0)
    loss_bce = jnp.mean(-(y * log_p + (1.0 - y) * log_1mp))

    def score(trip):
        e_h = entity_emb[trip[:, 0]].astype(jnp.float32)
        w_r = relation_emb[trip[:, 1]].astype(jnp.float32)
        e_t = entity_emb[trip[:, 2]].astype(jnp.float32)
        return jnp.sum(e_h * w_r * e_t, axis=-1)

    pos_s, neg_s = score(pos_triples), score(neg_triples)
    loss_rank = jnp.mean(jnp.maximum(margin - (pos_s - neg_s), 0.0))

    trip = jnp.concatenate([pos_triples, neg_triples], axis=0)
    h, r, t = trip[:, 0], trip[:, 1], trip[:, 2]
    d, rg = rel_domain[r], rel_range[r]
    dom_viol = (d >= 0) & ~(entity_types[h, jnp.maximum(d, 0)] > 0)
    rng_viol = (rg >= 0) & ~(entity_types[t, jnp.maximum(rg, 0)] > 0)
    penalty = jnp.mean((dom_viol | rng_viol).astype(jnp.float32))
    return alpha * loss_bce + beta * loss_rank + gamma * penalty


if __name__ == "__main__":
    key = jax.random.PRNGKey(0)
    B, D = 16, 128          # batch of triples, embedding dim
    NE, NR, NT = 64, 8, 4   # num entities, relations, ontology types

    keys = jax.random.split(key, 12)
    entity_emb = (0.1 * jax.random.normal(keys[0], (NE, D), jnp.float32)
                  ).astype(jnp.bfloat16)
    relation_emb = (0.1 * jax.random.normal(keys[1], (NR, D), jnp.float32)
                    ).astype(jnp.bfloat16)

    pred_probs = jax.nn.sigmoid(jax.random.normal(keys[2], (B,), jnp.float32))
    true_labels = jax.random.bernoulli(keys[3], 0.5, (B,)).astype(jnp.int32)
    pos_triples = jnp.stack([
        jax.random.randint(keys[4], (B,), 0, NE),
        jax.random.randint(keys[5], (B,), 0, NR),
        jax.random.randint(keys[6], (B,), 0, NE)], axis=1).astype(jnp.int32)
    neg_triples = pos_triples.at[:, 2].set(
        jax.random.randint(keys[7], (B,), 0, NE)).astype(jnp.int32)

    rel_domain = jax.random.randint(keys[8], (NR,), -1, NT).astype(jnp.int32)
    rel_range = jax.random.randint(keys[9], (NR,), -1, NT).astype(jnp.int32)
    entity_types = jax.random.bernoulli(keys[10], 0.5, (NE, NT)).astype(jnp.int32)

    loss = hybrid_loss_with_semantics(
        pred_probs, true_labels, entity_emb, relation_emb,
        pos_triples, neg_triples, rel_domain, rel_range, entity_types,
        margin=1.0, alpha=1.0, beta=1.0, gamma=1.0)
    loss = jax.block_until_ready(loss)

    ref = reference_loss(
        pred_probs, true_labels, entity_emb, relation_emb,
        pos_triples, neg_triples, rel_domain, rel_range, entity_types,
        margin=1.0, alpha=1.0, beta=1.0, gamma=1.0)
    np.testing.assert_allclose(np.asarray(loss), np.asarray(ref),
                               rtol=1e-5, atol=1e-5)
    print("KERNEL_OK")
</pallas_src>

<mosaic_0001>
module attributes {stable_mosaic.version = 11 : i64} {
  func.func @_hybrid_loss_kernel(%arg0: i32, %arg1: i32, %arg2: memref<1xi32, #tpu.memory_space<smem>>, %arg3: memref<8x128xf32, #tpu.memory_space<vmem>>, %arg4: memref<4x128x128xbf16, #tpu.memory_space<vmem>>, %arg5: memref<2x128x128xbf16, #tpu.memory_space<vmem>>, %arg6: memref<1x8x128xf32, #tpu.memory_space<vmem>>, %arg7: memref<1x128xf32, #tpu.memory_space<vmem>>, %arg8: memref<2x128xf32, #tpu.memory_space<vmem>>, %arg9: memref<1x1xf32, #tpu.memory_space<vmem>>) attributes {dimension_semantics = [#tpu.dimension_semantics<parallel>, #tpu.dimension_semantics<arbitrary>], iteration_bounds = array<i64: 2, 1>, scalar_prefetch = 1 : i64, scratch_operands = 3 : i64, tpu.core_type = #tpu.core_type<tc>, window_params = [{transform_indices = @transform_0, window_bounds = array<i64: 8, 128>}, {transform_indices = @transform_1, window_bounds = array<i64: 4, 128, 128>}, {transform_indices = @transform_2, window_bounds = array<i64: 2, 128, 128>}, {transform_indices = @transform_3, window_bounds = array<i64: 1, 8, 128>}]} {
    %c1_i32 = arith.constant 1 : i32
    %0 = arith.muli %arg0, %c1_i32 : i32
    %1 = arith.addi %0, %arg1 : i32
    %c128_i32 = arith.constant 128 : i32
    %2 = arith.muli %1, %c128_i32 : i32
    %c0 = arith.constant 0 : index
    %3 = memref.load %arg2[%c0] : memref<1xi32, #tpu.memory_space<smem>>
    %c0_i32 = arith.constant 0 : i32
    %4 = arith.cmpi eq, %arg1, %c0_i32 : i32
    %5 = arith.extui %4 : i1 to i32
    %c0_i32_0 = arith.constant 0 : i32
    %6 = arith.cmpi ne, %5, %c0_i32_0 : i32
    scf.if %6 {
      %cst_41 = arith.constant 0.000000e+00 : f32
      %92 = vector.broadcast %cst_41 : f32 to vector<1x128xf32>
      %c0_42 = arith.constant 0 : index
      %c0_43 = arith.constant 0 : index
      %93 = vector.load %arg7[%c0_42, %c0_43] : memref<1x128xf32, #tpu.memory_space<vmem>>, vector<1x128xf32>
      tpu.vector_store %arg7[%c0_42, %c0_43], %92 {strides = array<i32>} : memref<1x128xf32, #tpu.memory_space<vmem>>, vector<1x128xf32>,
      %cst_44 = arith.constant 0.000000e+00 : f32
      %94 = vector.broadcast %cst_44 : f32 to vector<2x128xf32>
      %c0_45 = arith.constant 0 : index
      %c0_46 = arith.constant 0 : index
      %95 = vector.load %arg8[%c0_45, %c0_46] : memref<2x128xf32, #tpu.memory_space<vmem>>, vector<2x128xf32>
      tpu.vector_store %arg8[%c0_45, %c0_46], %94 {strides = array<i32>} : memref<2x128xf32, #tpu.memory_space<vmem>>, vector<2x128xf32>,
      %cst_47 = arith.constant 0.000000e+00 : f32
      %96 = vector.broadcast %cst_47 : f32 to vector<1x1xf32>
      %c0_48 = arith.constant 0 : index
      %c0_49 = arith.constant 0 : index
      %97 = vector.load %arg9[%c0_48, %c0_49] : memref<1x1xf32, #tpu.memory_space<vmem>>, vector<1x1xf32>
      tpu.vector_store %arg9[%c0_48, %c0_49], %96 {strides = array<i32>} : memref<1x1xf32, #tpu.memory_space<vmem>>, vector<1x1xf32>,
    } else {
    }
    %c0_1 = arith.constant 0 : index
    %c0_2 = arith.constant 0 : index
    %7 = vector.load %arg3[%c0_1, %c0_2] : memref<8x128xf32, #tpu.memory_space<vmem>>, vector<8x128xf32>
    %8 = vector.extract_strided_slice %7 {offsets = [0, 0], sizes = [1, 128], strides = [1, 1]} : vector<8x128xf32> to vector<1x128xf32>
    %9 = vector.extract_strided_slice %7 {offsets = [1, 0], sizes = [1, 128], strides = [1, 1]} : vector<8x128xf32> to vector<1x128xf32>
    %10 = vector.extract_strided_slice %7 {offsets = [2, 0], sizes = [2, 128], strides = [1, 1]} : vector<8x128xf32> to vector<2x128xf32>
    %11 = tpu.iota {dimensions = array<i32: 1>} : vector<1x128xi32>
    %12 = vector.broadcast %2 : i32 to vector<1x128xi32>
    %13 = arith.addi %11, %12 : vector<1x128xi32>
    %14 = vector.broadcast %3 : i32 to vector<1x128xi32>
    %15 = arith.cmpi slt, %13, %14 : vector<1x128xi32>
    %16 = arith.extui %15 : vector<1x128xi1> to vector<1x128xi32>
    %17 = arith.sitofp %16 : vector<1x128xi32> to vector<1x128xf32>
    %18 = math.log %8 : vector<1x128xf32>
    %cst = arith.constant -1.000000e+02 : f32
    %19 = vector.broadcast %cst : f32 to vector<1x128xf32>
    %20 = arith.maximumf %18, %19 : vector<1x128xf32>
    %cst_3 = arith.constant 1.000000e+00 : f32
    %21 = vector.broadcast %cst_3 : f32 to vector<1x128xf32>
    %22 = arith.subf %21, %8 : vector<1x128xf32>
    %23 = math.log %22 : vector<1x128xf32>
    %cst_4 = arith.constant -1.000000e+02 : f32
    %24 = vector.broadcast %cst_4 : f32 to vector<1x128xf32>
    %25 = arith.maximumf %23, %24 : vector<1x128xf32>
    %26 = arith.mulf %9, %20 : vector<1x128xf32>
    %cst_5 = arith.constant 1.000000e+00 : f32
    %27 = vector.broadcast %cst_5 : f32 to vector<1x128xf32>
    %28 = arith.subf %27, %9 : vector<1x128xf32>
    %29 = arith.mulf %28, %25 : vector<1x128xf32>
    %30 = arith.addf %26, %29 : vector<1x128xf32>
    %cst_6 = arith.constant 0.000000e+00 : f32
    %31 = vector.broadcast %cst_6 : f32 to vector<1x128xf32>
    %32 = arith.subf %31, %30 : vector<1x128xf32>
    %c0_7 = arith.constant 0 : index
    %c0_8 = arith.constant 0 : index
    %33 = vector.load %arg7[%c0_7, %c0_8] : memref<1x128xf32, #tpu.memory_space<vmem>>, vector<1x128xf32>
    %34 = arith.mulf %17, %32 : vector<1x128xf32>
    %35 = arith.addf %33, %34 : vector<1x128xf32>
    %c0_9 = arith.constant 0 : index
    %c0_10 = arith.constant 0 : index
    %36 = vector.load %arg7[%c0_9, %c0_10] : memref<1x128xf32, #tpu.memory_space<vmem>>, vector<1x128xf32>
    tpu.vector_store %arg7[%c0_9, %c0_10], %35 {strides = array<i32>} : memref<1x128xf32, #tpu.memory_space<vmem>>, vector<1x128xf32>,
    %c0_11 = arith.constant 0 : index
    %c0_12 = arith.constant 0 : index
    %37 = vector.load %arg8[%c0_11, %c0_12] : memref<2x128xf32, #tpu.memory_space<vmem>>, vector<2x128xf32>
    %38 = vector.broadcast %17 : vector<1x128xf32> to vector<2x128xf32>
    %39 = arith.mulf %38, %10 : vector<2x128xf32>
    %40 = arith.addf %37, %39 : vector<2x128xf32>
    %c0_13 = arith.constant 0 : index
    %c0_14 = arith.constant 0 : index
    %41 = vector.load %arg8[%c0_13, %c0_14] : memref<2x128xf32, #tpu.memory_space<vmem>>, vector<2x128xf32>
    tpu.vector_store %arg8[%c0_13, %c0_14], %40 {strides = array<i32>} : memref<2x128xf32, #tpu.memory_space<vmem>>, vector<2x128xf32>,
    %c0_15 = arith.constant 0 : index
    %c0_16 = arith.constant 0 : index
    %c0_17 = arith.constant 0 : index
    %42 = vector.load %arg4[%c0_15, %c0_16, %c0_17] : memref<4x128x128xbf16, #tpu.memory_space<vmem>>, vector<1x128x128xbf16>
    %43 = vector.shape_cast %42 : vector<1x128x128xbf16> to vector<128x128xbf16>
    %44 = arith.extf %43 : vector<128x128xbf16> to vector<128x128xf32>
    %c1 = arith.constant 1 : index
    %c0_18 = arith.constant 0 : index
    %c0_19 = arith.constant 0 : index
    %45 = vector.load %arg4[%c1, %c0_18, %c0_19] : memref<4x128x128xbf16, #tpu.memory_space<vmem>>, vector<1x128x128xbf16>
    %46 = vector.shape_cast %45 : vector<1x128x128xbf16> to vector<128x128xbf16>
    %47 = arith.extf %46 : vector<128x128xbf16> to vector<128x128xf32>
    %c2 = arith.constant 2 : index
    %c0_20 = arith.constant 0 : index
    %c0_21 = arith.constant 0 : index
    %48 = vector.load %arg4[%c2, %c0_20, %c0_21] : memref<4x128x128xbf16, #tpu.memory_space<vmem>>, vector<1x128x128xbf16>
    %49 = vector.shape_cast %48 : vector<1x128x128xbf16> to vector<128x128xbf16>
    %50 = arith.extf %49 : vector<128x128xbf16> to vector<128x128xf32>
    %c3 = arith.constant 3 : index
    %c0_22 = arith.constant 0 : index
    %c0_23 = arith.constant 0 : index
    %51 = vector.load %arg4[%c3, %c0_22, %c0_23] : memref<4x128x128xbf16, #tpu.memory_space<vmem>>, vector<1x128x128xbf16>
    %52 = vector.shape_cast %51 : vector<1x128x128xbf16> to vector<128x128xbf16>
    %53 = arith.extf %52 : vector<128x128xbf16> to vector<128x128xf32>
    %c0_24 = arith.constant 0 : index
    %c0_25 = arith.constant 0 : index
    %c0_26 = arith.constant 0 : index
    %54 = vector.load %arg5[%c0_24, %c0_25, %c0_26] : memref<2x128x128xbf16, #tpu.memory_space<vmem>>, vector<1x128x128xbf16>
    %55 = vector.shape_cast %54 : vector<1x128x128xbf16> to vector<128x128xbf16>
    %56 = arith.extf %55 : vector<128x128xbf16> to vector<128x128xf32>
    %c1_27 = arith.constant 1 : index
    %c0_28 = arith.constant 0 : index
    %c0_29 = arith.constant 0 : index
    %57 = vector.load %arg5[%c1_27, %c0_28, %c0_29] : memref<2x128x128xbf16, #tpu.memory_space<vmem>>, vector<1x128x128xbf16>
    %58 = vector.shape_cast %57 : vector<1x128x128xbf16> to vector<128x128xbf16>
    %59 = arith.extf %58 : vector<128x128xbf16> to vector<128x128xf32>
    %60 = arith.mulf %44, %56 : vector<128x128xf32>
    %61 = arith.mulf %60, %47 : vector<128x128xf32>
    %cst_30 = arith.constant dense<0.000000e+00> : vector<128xf32>
    %62 = vector.multi_reduction <add>, %61, %cst_30 [1] : vector<128x128xf32> to vector<128xf32>
    %63 = vector.shape_cast %62 : vector<128xf32> to vector<128x1xf32>
    %64 = arith.mulf %50, %59 : vector<128x128xf32>
    %65 = arith.mulf %64, %53 : vector<128x128xf32>
    %cst_31 = arith.constant dense<0.000000e+00> : vector<128xf32>
    %66 = vector.multi_reduction <add>, %65, %cst_31 [1] : vector<128x128xf32> to vector<128xf32>
    %67 = vector.shape_cast %66 : vector<128xf32> to vector<128x1xf32>
    %68 = arith.subf %63, %67 : vector<128x1xf32>
    %cst_32 = arith.constant 1.000000e+00 : f32
    %69 = vector.broadcast %cst_32 : f32 to vector<128x1xf32>
    %70 = arith.subf %69, %68 : vector<128x1xf32>
    %cst_33 = arith.constant 0.000000e+00 : f32
    %71 = vector.broadcast %cst_33 : f32 to vector<128x1xf32>
    %72 = arith.maximumf %70, %71 : vector<128x1xf32>
    %73 = tpu.iota {dimensions = array<i32: 0>} : vector<128x1xi32>
    %74 = vector.broadcast %2 : i32 to vector<128x1xi32>
    %75 = arith.addi %73, %74 : vector<128x1xi32>
    %76 = vector.broadcast %3 : i32 to vector<128x1xi32>
    %77 = arith.cmpi slt, %75, %76 : vector<128x1xi32>
    %78 = arith.extui %77 : vector<128x1xi1> to vector<128x1xi32>
    %79 = arith.sitofp %78 : vector<128x1xi32> to vector<128x1xf32>
    %c0_34 = arith.constant 0 : index
    %c0_35 = arith.constant 0 : index
    %80 = vector.load %arg9[%c0_34, %c0_35] : memref<1x1xf32, #tpu.memory_space<vmem>>, vector<1x1xf32>
    %81 = arith.mulf %79, %72 : vector<128x1xf32>
    %82 = vector.shape_cast %81 : vector<128x1xf32> to vector<1x128x1xf32>
    %cst_36 = arith.constant dense<0.000000e+00> : vector<1xf32>
    %83 = vector.multi_reduction <add>, %82, %cst_36 [1, 2] : vector<1x128x1xf32> to vector<1xf32>
    %84 = vector.shape_cast %83 : vector<1xf32> to vector<1x1x1xf32>
    %85 = vector.extract %84[0, 0, 0] : f32 from vector<1x1x1xf32>
    %86 = vector.broadcast %85 : f32 to vector<1x1xf32>
    %87 = arith.addf %80, %86 : vector<1x1xf32>
    %c0_37 = arith.constant 0 : index
    %c0_38 = arith.constant 0 : index
    %88 = vector.load %arg9[%c0_37, %c0_38] : memref<1x1xf32, #tpu.memory_space<vmem>>, vector<1x1xf32>
    tpu.vector_store %arg9[%c0_37, %c0_38], %87 {strides = array<i32>} : memref<1x1xf32, #tpu.memory_space<vmem>>, vector<1x1xf32>,
    %c0_i32_39 = arith.constant 0 : i32
    %89 = arith.cmpi eq, %arg1, %c0_i32_39 : i32
    %90 = arith.extui %89 : i1 to i32
    %c0_i32_40 = arith.constant 0 : i32
    %91 = arith.cmpi ne, %90, %c0_i32_40 : i32
    scf.if %91 {
      %92 = arith.sitofp %3 : i32 to f32
      %cst_41 = arith.constant 1.000000e+00 : f32
      %93 = arith.divf %cst_41, %92 : f32
      %c0_42 = arith.constant 0 : index
      %c0_43 = arith.constant 0 : index
      %94 = vector.load %arg7[%c0_42, %c0_43] : memref<1x128xf32, #tpu.memory_space<vmem>>, vector<1x128xf32>
      %95 = vector.shape_cast %94 : vector<1x128xf32> to vector<1x1x128xf32>
      %cst_44 = arith.constant dense<0.000000e+00> : vector<1xf32>
      %96 = vector.multi_reduction <add>, %95, %cst_44 [1, 2] : vector<1x1x128xf32> to vector<1xf32>
      %97 = vector.shape_cast %96 : vector<1xf32> to vector<1x1x1xf32>
      %98 = vector.extract %97[0, 0, 0] : f32 from vector<1x1x1xf32>
      %cst_45 = arith.constant 1.000000e+00 : f32
      %99 = arith.mulf %cst_45, %98 : f32
      %c0_46 = arith.constant 0 : index
      %c0_47 = arith.constant 0 : index
      %100 = vector.load %arg9[%c0_46, %c0_47] : memref<1x1xf32, #tpu.memory_space<vmem>>, vector<1x1xf32>
      %101 = vector.extract %100[0, 0] : f32 from vector<1x1xf32>
      %cst_48 = arith.constant 1.000000e+00 : f32
      %102 = arith.mulf %cst_48, %101 : f32
      %103 = arith.addf %99, %102 : f32
      %c0_49 = arith.constant 0 : index
      %c0_50 = arith.constant 0 : index
      %104 = vector.load %arg8[%c0_49, %c0_50] : memref<2x128xf32, #tpu.memory_space<vmem>>, vector<2x128xf32>
      %105 = vector.shape_cast %104 : vector<2x128xf32> to vector<1x2x128xf32>
      %cst_51 = arith.constant dense<0.000000e+00> : vector<1xf32>
      %106 = vector.multi_reduction <add>, %105, %cst_51 [1, 2] : vector<1x2x128xf32> to vector<1xf32>
      %107 = vector.shape_cast %106 : vector<1xf32> to vector<1x1x1xf32>
      %108 = vector.extract %107[0, 0, 0] : f32 from vector<1x1x1xf32>
      %cst_52 = arith.constant 5.000000e-01 : f32
      %109 = arith.mulf %cst_52, %108 : f32
      %110 = arith.addf %103, %109 : f32
      %111 = arith.mulf %110, %93 : f32
      %112 = vector.broadcast %111 : f32 to vector<1x8x128xf32>
      %c0_53 = arith.constant 0 : index
      %c0_54 = arith.constant 0 : index
      %c0_55 = arith.constant 0 : index
      %113 = vector.load %arg6[%c0_53, %c0_54, %c0_55] : memref<1x8x128xf32, #tpu.memory_space<vmem>>, vector<1x8x128xf32>
      tpu.vector_store %arg6[%c0_53, %c0_54, %c0_55], %112 {strides = array<i32>} : memref<1x8x128xf32, #tpu.memory_space<vmem>>, vector<1x8x128xf32>,
    } else {
    }
    return
  }
  func.func @transform_0(%arg0: i32, %arg1: i32, %arg2: memref<1xi32, #tpu.memory_space<smem>>) -> (i32, i32) {
    %c1_i32 = arith.constant 1 : i32
    %0 = arith.muli %arg0, %c1_i32 : i32
    %1 = arith.addi %0, %arg1 : i32
    %c0_i32 = arith.constant 0 : i32
    %c0_i32_0 = arith.constant 0 : i32
    return %c0_i32, %1 : i32, i32
  }
  func.func @transform_1(%arg0: i32, %arg1: i32, %arg2: memref<1xi32, #tpu.memory_space<smem>>) -> (i32, i32, i32) {
    %c1_i32 = arith.constant 1 : i32
    %0 = arith.muli %arg0, %c1_i32 : i32
    %1 = arith.addi %0, %arg1 : i32
    %c0_i32 = arith.constant 0 : i32
    %c0_i32_0 = arith.constant 0 : i32
    %c0_i32_1 = arith.constant 0 : i32
    return %c0_i32, %1, %c0_i32_0 : i32, i32, i32
  }
  func.func @transform_2(%arg0: i32, %arg1: i32, %arg2: memref<1xi32, #tpu.memory_space<smem>>) -> (i32, i32, i32) {
    %c1_i32 = arith.constant 1 : i32
    %0 = arith.muli %arg0, %c1_i32 : i32
    %1 = arith.addi %0, %arg1 : i32
    %c0_i32 = arith.constant 0 : i32
    %c0_i32_0 = arith.constant 0 : i32
    %c0_i32_1 = arith.constant 0 : i32
    return %c0_i32, %1, %c0_i32_0 : i32, i32, i32
  }
  func.func @transform_3(%arg0: i32, %arg1: i32, %arg2: memref<1xi32, #tpu.memory_space<smem>>) -> (i32, i32, i32) {
    %c0_i32 = arith.constant 0 : i32
    %c0_i32_0 = arith.constant 0 : i32
    %c0_i32_1 = arith.constant 0 : i32
    return %arg0, %c0_i32, %c0_i32_0 : i32, i32, i32
  }
}

</mosaic_0001>

<llo_original>
// kernel: tpu_custom_call.1
$region0: #{tpu_custom_call.1}
  #allocation0 [shape = 'u32[]', space=smem, size = 0x4, offset = 0x4, fixed_abs, tag = 'smem constant byte address 0x4 - core index']
  #allocation1 [shape = 'u32[144,128]{1,0:T(1,128)}', space=vmem, size = 0x12000, scoped, tag = 'internal scratch']
  #allocation2 [shape = 'f32[1,128]{1,0:T(1,128)}', space=vmem, size = 0x200, scoped, tag = 'scratch operand']
  #allocation3 [shape = 'f32[2,128]{1,0:T(2,128)}', space=vmem, size = 0x400, scoped, tag = 'scratch operand']
  #allocation4 [shape = 'f32[1,1]{1,0:T(1,128)}', space=vmem, size = 0x200, scoped, tag = 'scratch operand']
  #allocation5 [shape = 's32[1]{0}', space=sflag, size = 0x4, scoped, tag = 'scoped memory for tpu_custom_call.1']
  #allocation6 [shape = 's32[1]{0:T(128)S(6)}', space=smem, size = 0x200, scoped, tag = 'prefetched SMEM operand 0']
  #allocation14 [shape = 's32[]', space=sflag, size = 0x4, offset = 0, fixed_abs, tag = 'sflag constant byte address 0x0 - dummy sync flag']
  #allocation16 [shape = 's32[]', space=sflag, size = 0x4, offset = 0, fixed_abs, tag = 'sflag constant byte address 0x0 - dummy sync flag']
  %s0 = inlined_call_operand.<no memory space> [shape: s32[1], index: 0, kind: input, shape index: {}]
  %s1 = inlined_call_operand.hbm [shape: f32[8,256], index: 1, kind: input, shape index: {}]
  %s2 = inlined_call_operand.hbm [shape: bf16[4,256,128], index: 2, kind: input, shape index: {}]
  %s3 = inlined_call_operand.hbm [shape: bf16[2,256,128], index: 3, kind: input, shape index: {}]
  %s4 = inlined_call_operand.hbm [shape: f32[2,8,128], index: 4, kind: output, shape index: {}]
  %s5 = sld [smem:[#allocation0]]
  $region65: #{tpu_custom_call.1} parent=0
    _
  %s7 = ssub.s32 1, %s5
  %s8 = scalar_select 0, %s7, %s5
  %9 = sst [smem:[#allocation6]] %s0
  $region1: #{tpu_custom_call.1} parent=0
    #allocation7 [shape = 'u8[8192]{0}', space=vmem, size = 0x2000, scoped, tag = 'input window, operand 1']
    #allocation8 [shape = 's32[2]{0}', space=sflag, size = 0x8, scoped, tag = 'scoped memory for tpu_custom_call.1']
    #allocation9 [shape = 's32[2]{0}', space=sflag, size = 0x8, scoped, tag = 'scoped memory for tpu_custom_call.1']
    #allocation10 [shape = 'u8[262144]{0}', space=vmem, size = 0x40000, scoped, tag = 'input window, operand 2']
    #allocation11 [shape = 's32[2]{0}', space=sflag, size = 0x8, scoped, tag = 'scoped memory for tpu_custom_call.1']
    #allocation12 [shape = 'u8[131072]{0}', space=vmem, size = 0x20000, scoped, tag = 'input window, operand 3']
    #allocation13 [shape = 'u8[8192]{0}', space=vmem, size = 0x2000, scoped, tag = 'output window, operand 0']
    %10 = vsyncpa [#allocation8], 0
    %s11 = scalar_lea.sflag [#allocation8], 1
    %12 = vsyncpa %s11, 0
    %13 = vsyncpa [#allocation11], 0
    %s14 = scalar_lea.sflag [#allocation11], 1
    %15 = vsyncpa %s14, 0
    %16 = vsyncpa [#allocation9], 0
    %s17 = scalar_lea.sflag [#allocation9], 1
    %18 = vsyncpa %s17, 0
    loop: start=0, step=1, limit=4
    $region2: #{tpu_custom_call.1} parent=1 // loop_pre_header
      _
    $region3: #{tpu_custom_call.1} parent=1 // loop_header
      %s20 = sphi 0, %s24
      %p21 = scmp.ge.s32.totalorder %s20, 4
      %s27 = sphi 0, %s39
      %s28 = sphi 0, %s35
      %s29 = sphi 0, %s27
      %s30 = sphi 0, %s28
      %s31 = sphi 0, %s29
      %s32 = sphi 0, %s30
      %s44 = sphi 0, %s46
      %s47 = sphi 0, %s44
      %s48 = sphi 0, %s47
      %s64 = sphi 0, %s48
      %s72 = sphi 0, %s74
      %s75 = sphi 0, %s72
      %s76 = sphi 0, %s75
      %s92 = sphi 0, %s76
      %s100 = sphi 0, %s102
      %s103 = sphi 0, %s100
      %s104 = sphi 0, %s103
      %s120 = sphi 0, %s104
      %s126 = sphi 0, %s128
      %s129 = sphi 0, %s126
      %s130 = sphi 0, %s129
      %s146 = sphi 0, %s130
    $region4: #{tpu_custom_call.1} parent=1 // loop_header_branch
      %23 = sbr.rel (%p21) target = $region8
    $region5: #{tpu_custom_call.1} parent=1 // loop_body
      %s25 = ssub.s32 %s20, 1
      %s26 = ssub.s32 %s20, 2
      %s33 = sadd.s32 1, %s28
      %p34 = scmp.ge.s32.totalorder %s33, 1
      %s35 = scalar_select %p34, 0, %s33
      %s36 = sadd.s32 1, %s27
      %s37 = scalar_select %p34, %s36, %s27
      %p38 = scmp.ge.s32.totalorder %s37, 2
      %s39 = scalar_select %p38, 0, %s37
      %s40 = sadd.s32 %s27, %s28
      %s41 = sadd.s32 %s39, %s35
      %s42 = ssub.s32 %s40, %s41
      %p43 = scmp.eq.s32.totalorder %s42, 0
      %s45 = sadd.s32 %s44, 1
      %s46 = scalar_select %p43, %s44, %s45
      %p49 = pneg %p43
      %p50 = scmp.eq.s32.totalorder %s20, 1
      %p51 = por %p49, %p50
      %p52 = scmp.ne.s32.totalorder %s44, %s47
      %p53 = scmp.eq.s32.totalorder %s20, 0
      %p54 = por %p52, %p53
      %p55 = scmp.ne.s32.totalorder %s44, %s47
      %p56 = scmp.eq.s32.totalorder %s25, 1
      %p57 = por %p55, %p56
      %p58 = scmp.ne.s32.totalorder %s47, %s48
      %p59 = scmp.eq.s32.totalorder %s25, 0
      %p60 = por %p58, %p59
      %p61 = scmp.ne.s32.totalorder %s47, %s48
      %p62 = scmp.eq.s32.totalorder %s26, 1
      %p63 = por %p61, %p62
      %p65 = scmp.ne.s32.totalorder %s48, %s64
      %p66 = scmp.eq.s32.totalorder %s26, 0
      %p67 = por %p65, %p66
      %s68 = sadd.s32 %s27, %s28
      %s69 = sadd.s32 %s39, %s35
      %s70 = ssub.s32 %s68, %s69
      %p71 = scmp.eq.s32.totalorder %s70, 0
      %s73 = sadd.s32 %s72, 1
      %s74 = scalar_select %p71, %s72, %s73
      %p77 = pneg %p71
      %p78 = scmp.eq.s32.totalorder %s20, 1
      %p79 = por %p77, %p78
      %p80 = scmp.ne.s32.totalorder %s72, %s75
      %p81 = scmp.eq.s32.totalorder %s20, 0
      %p82 = por %p80, %p81
      %p83 = scmp.ne.s32.totalorder %s72, %s75
      %p84 = scmp.eq.s32.totalorder %s25, 1
      %p85 = por %p83, %p84
      %p86 = scmp.ne.s32.totalorder %s75, %s76
      %p87 = scmp.eq.s32.totalorder %s25, 0
      %p88 = por %p86, %p87
      %p89 = scmp.ne.s32.totalorder %s75, %s76
      %p90 = scmp.eq.s32.totalorder %s26, 1
      %p91 = por %p89, %p90
      %p93 = scmp.ne.s32.totalorder %s76, %s92
      %p94 = scmp.eq.s32.totalorder %s26, 0
      %p95 = por %p93, %p94
      %s96 = sadd.s32 %s27, %s28
      %s97 = sadd.s32 %s39, %s35
      %s98 = ssub.s32 %s96, %s97
      %p99 = scmp.eq.s32.totalorder %s98, 0
      %s101 = sadd.s32 %s100, 1
      %s102 = scalar_select %p99, %s100, %s101
      %p105 = pneg %p99
      %p106 = scmp.eq.s32.totalorder %s20, 1
      %p107 = por %p105, %p106
      %p108 = scmp.ne.s32.totalorder %s100, %s103
      %p109 = scmp.eq.s32.totalorder %s20, 0
      %p110 = por %p108, %p109
      %p111 = scmp.ne.s32.totalorder %s100, %s103
      %p112 = scmp.eq.s32.totalorder %s25, 1
      %p113 = por %p111, %p112
      %p114 = scmp.ne.s32.totalorder %s103, %s104
      %p115 = scmp.eq.s32.totalorder %s25, 0
      %p116 = por %p114, %p115
      %p117 = scmp.ne.s32.totalorder %s103, %s104
      %p118 = scmp.eq.s32.totalorder %s26, 1
      %p119 = por %p117, %p118
      %p121 = scmp.ne.s32.totalorder %s104, %s120
      %p122 = scmp.eq.s32.totalorder %s26, 0
      %p123 = por %p121, %p122
      %s124 = ssub.s32 %s27, %s39
      %p125 = scmp.eq.s32.totalorder %s124, 0
      %s127 = sadd.s32 %s126, 1
      %s128 = scalar_select %p125, %s126, %s127
      %p131 = pneg %p125
      %p132 = scmp.eq.s32.totalorder %s20, 1
      %p133 = por %p131, %p132
      %p134 = scmp.ne.s32.totalorder %s126, %s129
      %p135 = scmp.eq.s32.totalorder %s20, 0
      %p136 = por %p134, %p135
      %p137 = scmp.ne.s32.totalorder %s126, %s129
      %p138 = scmp.eq.s32.totalorder %s25, 1
      %p139 = por %p137, %p138
      %p140 = scmp.ne.s32.totalorder %s129, %s130
      %p141 = scmp.eq.s32.totalorder %s25, 0
      %p142 = por %p140, %p141
      %p143 = scmp.ne.s32.totalorder %s129, %s130
      %p144 = scmp.eq.s32.totalorder %s26, 1
      %p145 = por %p143, %p144
      %p147 = scmp.ne.s32.totalorder %s130, %s146
      %p148 = scmp.eq.s32.totalorder %s26, 0
      %p149 = por %p147, %p148
      %p150 = scmp.le.s32.totalorder 1, %s20
      %p151 = scmp.lt.s32.totalorder %s20, 3
      %p152 = pnand %p150, %p151
      %p153 = pneg %p152
      // Predicated region
      $region9: #{tpu_custom_call.1} parent=5 // pred_check
        _
      $region10: #{tpu_custom_call.1} parent=5 // pred_check_branch
        %155 = sbr.rel (%p152) target = $region12
      $region11: #{tpu_custom_call.1} parent=5 // pred_region
        %s156 = ssub.s32 %s20, 1
      $region12: #{tpu_custom_call.1} parent=5 // pred_fallthru
        _
      %p157 = scmp.lt.s32.totalorder %s20, 2
      // Predicated region
      $region13: #{tpu_custom_call.1} parent=5 // pred_check
        %p158 = pneg %p157
      $region14: #{tpu_custom_call.1} parent=5 // pred_check_branch
        %160 = sbr.rel (%p158) target = $region16
      $region15: #{tpu_custom_call.1} parent=5 // pred_region
        // Predicated region
        $region17: #{tpu_custom_call.1} parent=15 // pred_check
          %p161 = pneg %p54
        $region18: #{tpu_custom_call.1} parent=15 // pred_check_branch
          %163 = sbr.rel (%p161) target = $region20
        $region19: #{tpu_custom_call.1} parent=15 // pred_region
          %s164 = sand.u32 %s44, 1
          %s165 = scalar_lea.sflag [#allocation8], %s164
          %s166 = sand.u32 %s44, 1
          %s167 = smul.addr %s166, 8
          %s168 = scalar_lea.vmem [#allocation7], %s167
          %s169 = sadd.s32 %s27, %s28
          %s171 = ssub.s32 128, 128
          %172 = vsyncadd %s165, %s171
          %s173 = smul.addr %s169, 128
          %s174 = scalar_lea.hbm %s1, %s173
          %s176 = sshll.u32 %s168, 4
          %s177 = int_to_ptr.vmem [resolvable:$true] %s176
          %179 = dma.hbm_to_vmem [thread:$0]  %s174, 128, %s177, %s165
        $region20: #{tpu_custom_call.1} parent=15 // pred_fallthru
          _
        // Predicated region
        $region21: #{tpu_custom_call.1} parent=15 // pred_check
          %p180 = pneg %p82
        $region22: #{tpu_custom_call.1} parent=15 // pred_check_branch
          %182 = sbr.rel (%p180) target = $region24
        $region23: #{tpu_custom_call.1} parent=15 // pred_region
          #allocation15 [shape = 'u32[6]{0}', space=smem, size = 0x18, scoped, tag = 'DMA stride descriptor']
          %s183 = sand.u32 %s20, 1
          %s184 = scalar_lea.sflag [#allocation11], %s183
          %s185 = sand.u32 %s72, 1
          %s186 = smul.addr %s185, 256
          %s187 = scalar_lea.vmem [#allocation10], %s186
          %s188 = sadd.s32 %s27, %s28
          %s189 = smul.u32 16, %s188
          %s191 = ssub.s32 4096, 4096
          %192 = vsyncadd %s184, %s191
          %s193 = smul.addr %s189, 64
          %s194 = scalar_lea.hbm %s2, %s193
          %s196 = sshll.u32 1, 14
          %s197 = sxor.u32 4294967295, %s196
          %s199 = sld [smem:[#allocation0]]
          %s200 = sadd.s32 2, %s199
          %s202 = sshll.u32 7, 26
          %s203 = sxor.u32 4294967295, %s202
          %s204 = sand.u32 0, %s203
          %s205 = sshll.u32 %s200, 26
          %s206 = sor.u32 %s204, %s205
          %s207 = sshll.u32 %s187, 4
          %s208 = int_to_ptr.vmem [resolvable:$true] %s207
          %214 = sst [smem:[#allocation15]] 2048
          %s215 = scalar_lea.smem [#allocation15], 1
          %216 = sst [smem:[%s215]] 1024
          %s217 = scalar_lea.smem [#allocation15], 2
          %218 = sst [smem:[%s217]] 16
          %s219 = scalar_lea.smem [#allocation15], 3
          %220 = sst [smem:[%s219]] 64
          %s221 = scalar_lea.smem [#allocation15], 4
          %222 = sst [smem:[%s221]] 64
          %s223 = scalar_lea.smem [#allocation15], 5
          %224 = sst [smem:[%s223]] 4
          %226 = dma.general %s194, 4096, %s208, %s184, 131072, [#allocation15], %s206, 0
        $region24: #{tpu_custom_call.1} parent=15 // pred_fallthru
          _
        // Predicated region
        $region25: #{tpu_custom_call.1} parent=15 // pred_check
          %p227 = pneg %p110
        $region26: #{tpu_custom_call.1} parent=15 // pred_check_branch
          %229 = sbr.rel (%p227) target = $region28
        $region27: #{tpu_custom_call.1} parent=15 // pred_region
          #allocation17 [shape = 'u32[6]{0}', space=smem, size = 0x18, scoped, tag = 'DMA stride descriptor']
          %s230 = sand.u32 %s20, 1
          %s231 = scalar_lea.sflag [#allocation11], %s230
          %s232 = sand.u32 %s100, 1
          %s233 = smul.addr %s232, 128
          %s234 = scalar_lea.vmem [#allocation12], %s233
          %s235 = sadd.s32 %s27, %s28
          %s236 = smul.u32 16, %s235
          %s238 = ssub.s32 2048, 2048
          %239 = vsyncadd %s231, %s238
          %s240 = smul.addr %s236, 64
          %s241 = scalar_lea.hbm %s3, %s240
          %s243 = sshll.u32 1, 14
          %s244 = sxor.u32 4294967295, %s243
          %s246 = sld [smem:[#allocation0]]
          %s247 = sadd.s32 2, %s246
          %s249 = sshll.u32 7, 26
          %s250 = sxor.u32 4294967295, %s249
          %s251 = sand.u32 0, %s250
          %s252 = sshll.u32 %s247, 26
          %s253 = sor.u32 %s251, %s252
          %s254 = sshll.u32 %s234, 4
          %s255 = int_to_ptr.vmem [resolvable:$true] %s254
          %261 = sst [smem:[#allocation17]] 2048
          %s262 = scalar_lea.smem [#allocation17], 1
          %263 = sst [smem:[%s262]] 1024
          %s264 = scalar_lea.smem [#allocation17], 2
          %265 = sst [smem:[%s264]] 16
          %s266 = scalar_lea.smem [#allocation17], 3
          %267 = sst [smem:[%s266]] 64
          %s268 = scalar_lea.smem [#allocation17], 4
          %269 = sst [smem:[%s268]] 64
          %s270 = scalar_lea.smem [#allocation17], 5
          %271 = sst [smem:[%s270]] 4
          %273 = dma.general %s241, 2048, %s255, %s231, 131072, [#allocation17], %s253, 0
        $region28: #{tpu_custom_call.1} parent=15 // pred_fallthru
          _
      $region16: #{tpu_custom_call.1} parent=5 // pred_fallthru
        _
      %p274 = scmp.le.s32.totalorder 1, %s20
      %p275 = scmp.lt.s32.totalorder %s20, 3
      %p276 = pnand %p274, %p275
      %p277 = pneg %p276
      // Predicated region
      $region29: #{tpu_custom_call.1} parent=5 // pred_check
        _
      $region30: #{tpu_custom_call.1} parent=5 // pred_check_branch
        %279 = sbr.rel (%p276) target = $region32
      $region31: #{tpu_custom_call.1} parent=5 // pred_region
        %s280 = ssub.s32 %s20, 1
        %s281 = sand.u32 %s47, 1
        %s282 = scalar_lea.sflag [#allocation8], %s281
        %s283 = sand.u32 %s47, 1
        %s284 = smul.addr %s283, 8
        %s285 = scalar_lea.vmem [#allocation7], %s284
        // Predicated region
        $region33: #{tpu_custom_call.1} parent=31 // pred_check
          %p286 = pneg %p60
        $region34: #{tpu_custom_call.1} parent=31 // pred_check_branch
          %288 = sbr.rel (%p286) target = $region36
        $region35: #{tpu_custom_call.1} parent=31 // pred_region
          %289 = dma.done %s282, 128
        $region36: #{tpu_custom_call.1} parent=31 // pred_fallthru
          _
        %s290 = sand.u32 %s25, 1
        %s291 = scalar_lea.sflag [#allocation11], %s290
        %s292 = sand.u32 %s75, 1
        %s293 = smul.addr %s292, 256
        %s294 = scalar_lea.vmem [#allocation10], %s293
        // Predicated region
        $region37: #{tpu_custom_call.1} parent=31 // pred_check
          %p295 = pneg %p88
        $region38: #{tpu_custom_call.1} parent=31 // pred_check_branch
          %297 = sbr.rel (%p295) target = $region40
        $region39: #{tpu_custom_call.1} parent=31 // pred_region
          %298 = dma.done %s291, 4096
        $region40: #{tpu_custom_call.1} parent=31 // pred_fallthru
          _
        %s299 = sand.u32 %s25, 1
        %s300 = scalar_lea.sflag [#allocation11], %s299
        %s301 = sand.u32 %s103, 1
        %s302 = smul.addr %s301, 128
        %s303 = scalar_lea.vmem [#allocation12], %s302
        // Predicated region
        $region41: #{tpu_custom_call.1} parent=31 // pred_check
          %p304 = pneg %p116
        $region42: #{tpu_custom_call.1} parent=31 // pred_check_branch
          %306 = sbr.rel (%p304) target = $region44
        $region43: #{tpu_custom_call.1} parent=31 // pred_region
          %307 = dma.done %s300, 2048
        $region44: #{tpu_custom_call.1} parent=31 // pred_fallthru
          _
        %s308 = sand.u32 %s47, 1
        %s309 = scalar_lea.sflag [#allocation8], %s308
        %s310 = sand.u32 %s47, 1
        %s311 = smul.addr %s310, 8
        %s312 = scalar_lea.vmem [#allocation7], %s311
        %p313 = pneg %p60
        %p314 = pneg %p57
        %s315 = sand.u32 %s25, 1
        %s316 = scalar_lea.sflag [#allocation11], %s315
        %s317 = sand.u32 %s75, 1
        %s318 = smul.addr %s317, 256
        %s319 = scalar_lea.vmem [#allocation10], %s318
        %p320 = pneg %p88
        %p321 = pneg %p85
        %s322 = sand.u32 %s25, 1
        %s323 = scalar_lea.sflag [#allocation11], %s322
        %s324 = sand.u32 %s103, 1
        %s325 = smul.addr %s324, 128
        %s326 = scalar_lea.vmem [#allocation12], %s325
        %p327 = pneg %p116
        %p328 = pneg %p113
        %p329 = pneg %p142
        %p330 = pneg %p139
        %s331 = sand.u32 %s129, 1
        %s332 = scalar_lea.sflag [#allocation9], %s331
        %s333 = sand.u32 %s129, 1
        %s334 = smul.addr %s333, 8
        %s335 = scalar_lea.vmem [#allocation13], %s334
        %s336 = sadd.s32 %s29, %s30
        %s337 = sadd.s32 %s29, %s30
        %s338 = smul.u32 16, %s337
        %s339 = sadd.s32 %s29, %s30
        %s340 = smul.u32 16, %s339
        %s341 = sadd.s32 %s29, %s30
        %s342 = smul.u32 %s341, 128
        %s343 = sld [smem:[#allocation6]]
        %p344 = scmp.eq.s32.totalorder %s30, 0
        // Predicated region
        $region45: #{tpu_custom_call.1} parent=31 // pred_check
          %p345 = pneg %p344
        $region46: #{tpu_custom_call.1} parent=31 // pred_check_branch
          %347 = sbr.rel (%p345) target = $region48
        $region47: #{tpu_custom_call.1} parent=31 // pred_region
          %348 = vst [vmem:[#allocation2] sm:$0x1] 0.0
          %349 = vst [vmem:[#allocation3] sm:$0x3] 0.0
          %vm350 = vcmask 0
          %351 = vst.msk [vmem:[#allocation4] sm:$0x1] %vm350, 0.0
        $region48: #{tpu_custom_call.1} parent=31 // pred_fallthru
          _
        %v352 = vld [vmem:[%s285] sm:$0xff]
        %v353 = vlaneseq
        %v354 = vand.u32 %v353, 127
        %v355 = vstv %s342
        %v356 = vadd.s32 %v354, %v355
        %v357 = vstv %s343
        %vm358 = vcmp.lt.s32.totalorder %v356, %v357
        %v359 = vsel %vm358, 1, 0
        %v360 = vcvt.s32.f32 %v359
        %v361 = vlog2.pop %v352
        %v362 = vmul.f32 %v361, 0.6931472
        %v363 = vmax.f32 %v362, -100.0
        %v364 = vsub.f32 1.0, %v352
        %v365 = vlog2.pop %v364
        %v366 = vmul.f32 %v365, 0.6931472
        %v367 = vmax.f32 %v366, -100.0
        %v369 = vrot.slane %v363, 7
        %v371 = vmul.f32 %v352, %v369
        %v373 = vrot.slane %v367, 7
        %v375 = vmul.f32 %v364, %v373
        %v376 = vadd.f32 %v371, %v375
        %v377 = vsub.f32 0.0, %v376
        %v378 = vld [vmem:[#allocation2] sm:$0x1]
        %v379 = vmul.f32 %v360, %v377
        %v382 = vunpack.c.l.s4 1966171168
        %v383 = vunpack.c.0.s8 %v382
        %v384 = vlaneseq
        %v385 = vshrl.u32 %v384, 7
        %v386 = vsub.s32 %v383, %v385
        %v387 = vrot.slane %v379, %v386
        %v388 = vcombine.high %v387, %v387
        %v390 = vunpack.c.l.s4 1966171168
        %v391 = vunpack.c.0.s8 %v390
        %v392 = vlaneseq
        %v393 = vshrl.u32 %v392, 7
        %v394 = vsub.s32 %v391, %v393
        %v395 = vrot.slane %v388, %v394
        %v397 = vadd.f32 %v378, %v395
        %398 = vst [vmem:[#allocation2] sm:$0x1] %v397
        %v399 = vld [vmem:[#allocation3] sm:$0x3]
        %v400 = vmul.f32 %v360, %v352
        %v402 = vrot.slane %v400, 2
        %v404 = vadd.f32 %v399, %v402
        %405 = vst [vmem:[#allocation3] sm:$0x3] %v404
        %v406 = vld [vmem:[%s294] sm:$0xf]
        %v407 = vld [vmem:[%s294 + $0x4] sm:$0xf]
        %v408 = vld [vmem:[%s294 + $0x8] sm:$0xf]
        %v409 = vld [vmem:[%s294 + $0xc] sm:$0xf]
        %v410 = vld [vmem:[%s294 + $0x10] sm:$0xf]
        %v411 = vld [vmem:[%s294 + $0x14] sm:$0xf]
        %v412 = vld [vmem:[%s294 + $0x18] sm:$0xf]
        %v413 = vld [vmem:[%s294 + $0x1c] sm:$0xf]
        %v414 = vld [vmem:[%s294 + $0x20] sm:$0xf]
        %v415 = vld [vmem:[%s294 + $0x24] sm:$0xf]
        %v416 = vld [vmem:[%s294 + $0x28] sm:$0xf]
        %v417 = vld [vmem:[%s294 + $0x2c] sm:$0xf]
        %v418 = vld [vmem:[%s294 + $0x30] sm:$0xf]
        %v419 = vld [vmem:[%s294 + $0x34] sm:$0xf]
        %v420 = vld [vmem:[%s294 + $0x38] sm:$0xf]
        %v421 = vld [vmem:[%s294 + $0x3c] sm:$0xf]
        %v422 = vunpack.c.l.bf16 %v406
        %v423 = vunpack.c.l.bf16 %v407
        %v424 = vunpack.c.l.bf16 %v408
        %v425 = vunpack.c.l.bf16 %v409
        %v426 = vunpack.c.l.bf16 %v410
        %v427 = vunpack.c.l.bf16 %v411
        %v428 = vunpack.c.l.bf16 %v412
        %v429 = vunpack.c.l.bf16 %v413
        %v430 = vunpack.c.l.bf16 %v414
        %v431 = vunpack.c.l.bf16 %v415
        %v432 = vunpack.c.l.bf16 %v416
        %v433 = vunpack.c.l.bf16 %v417
        %v434 = vunpack.c.l.bf16 %v418
        %v435 = vunpack.c.l.bf16 %v419
        %v436 = vunpack.c.l.bf16 %v420
        %v437 = vunpack.c.l.bf16 %v421
        %s438 = scalar_lea.vmem %s294, 64 [#allocation10]
        %v439 = vld [vmem:[%s438] sm:$0xf]
        %v440 = vld [vmem:[%s438 + $0x4] sm:$0xf]
        %v441 = vld [vmem:[%s438 + $0x8] sm:$0xf]
        %v442 = vld [vmem:[%s438 + $0xc] sm:$0xf]
        %v443 = vld [vmem:[%s438 + $0x10] sm:$0xf]
        %v444 = vld [vmem:[%s438 + $0x14] sm:$0xf]
        %v445 = vld [vmem:[%s438 + $0x18] sm:$0xf]
        %v446 = vld [vmem:[%s438 + $0x1c] sm:$0xf]
        %v447 = vld [vmem:[%s438 + $0x20] sm:$0xf]
        %v448 = vld [vmem:[%s438 + $0x24] sm:$0xf]
        %v449 = vld [vmem:[%s438 + $0x28] sm:$0xf]
        %v450 = vld [vmem:[%s438 + $0x2c] sm:$0xf]
        %v451 = vld [vmem:[%s438 + $0x30] sm:$0xf]
        %v452 = vld [vmem:[%s438 + $0x34] sm:$0xf]
        %v453 = vld [vmem:[%s438 + $0x38] sm:$0xf]
        %v454 = vld [vmem:[%s438 + $0x3c] sm:$0xf]
        %v455 = vunpack.c.l.bf16 %v439
        %v456 = vunpack.c.l.bf16 %v440
        %v457 = vunpack.c.l.bf16 %v441
        %v458 = vunpack.c.l.bf16 %v442
        %v459 = vunpack.c.l.bf16 %v443
        %v460 = vunpack.c.l.bf16 %v444
        %v461 = vunpack.c.l.bf16 %v445
        %v462 = vunpack.c.l.bf16 %v446
        %v463 = vunpack.c.l.bf16 %v447
        %v464 = vunpack.c.l.bf16 %v448
        %v465 = vunpack.c.l.bf16 %v449
        %v466 = vunpack.c.l.bf16 %v450
        %v467 = vunpack.c.l.bf16 %v451
        %v468 = vunpack.c.l.bf16 %v452
        %v469 = vunpack.c.l.bf16 %v453
        %v470 = vunpack.c.l.bf16 %v454
        %s471 = scalar_lea.vmem %s294, 128 [#allocation10]
        %v472 = vld [vmem:[%s471] sm:$0xf]
        %v473 = vld [vmem:[%s471 + $0x4] sm:$0xf]
        %v474 = vld [vmem:[%s471 + $0x8] sm:$0xf]
        %v475 = vld [vmem:[%s471 + $0xc] sm:$0xf]
        %v476 = vld [vmem:[%s471 + $0x10] sm:$0xf]
        %v477 = vld [vmem:[%s471 + $0x14] sm:$0xf]
        %v478 = vld [vmem:[%s471 + $0x18] sm:$0xf]
        %v479 = vld [vmem:[%s471 + $0x1c] sm:$0xf]
        %v480 = vld [vmem:[%s471 + $0x20] sm:$0xf]
        %v481 = vld [vmem:[%s471 + $0x24] sm:$0xf]
        %v482 = vld [vmem:[%s471 + $0x28] sm:$0xf]
        %v483 = vld [vmem:[%s471 + $0x2c] sm:$0xf]
        %v484 = vld [vmem:[%s471 + $0x30] sm:$0xf]
        %v485 = vld [vmem:[%s471 + $0x34] sm:$0xf]
        %v486 = vld [vmem:[%s471 + $0x38] sm:$0xf]
        %v487 = vld [vmem:[%s471 + $0x3c] sm:$0xf]
        %v488 = vunpack.c.l.bf16 %v472
        %v489 = vunpack.c.l.bf16 %v473
        %v490 = vunpack.c.l.bf16 %v474
        %v491 = vunpack.c.l.bf16 %v475
        %v492 = vunpack.c.l.bf16 %v476
        %v493 = vunpack.c.l.bf16 %v477
        %v494 = vunpack.c.l.bf16 %v478
        %v495 = vunpack.c.l.bf16 %v479
        %v496 = vunpack.c.l.bf16 %v480
        %v497 = vunpack.c.l.bf16 %v481
        %v498 = vunpack.c.l.bf16 %v482
        %v499 = vunpack.c.l.bf16 %v483
        %v500 = vunpack.c.l.bf16 %v484
        %v501 = vunpack.c.l.bf16 %v485
        %v502 = vunpack.c.l.bf16 %v486
        %v503 = vunpack.c.l.bf16 %v487
        %s504 = scalar_lea.vmem %s294, 192 [#allocation10]
        %v505 = vld [vmem:[%s504] sm:$0xf]
        %v506 = vld [vmem:[%s504 + $0x4] sm:$0xf]
        %v507 = vld [vmem:[%s504 + $0x8] sm:$0xf]
        %v508 = vld [vmem:[%s504 + $0xc] sm:$0xf]
        %v509 = vld [vmem:[%s504 + $0x10] sm:$0xf]
        %v510 = vld [vmem:[%s504 + $0x14] sm:$0xf]
        %v511 = vld [vmem:[%s504 + $0x18] sm:$0xf]
        %v512 = vld [vmem:[%s504 + $0x1c] sm:$0xf]
        %v513 = vld [vmem:[%s504 + $0x20] sm:$0xf]
        %v514 = vld [vmem:[%s504 + $0x24] sm:$0xf]
        %v515 = vld [vmem:[%s504 + $0x28] sm:$0xf]
        %v516 = vld [vmem:[%s504 + $0x2c] sm:$0xf]
        %v517 = vld [vmem:[%s504 + $0x30] sm:$0xf]
        %v518 = vld [vmem:[%s504 + $0x34] sm:$0xf]
        %v519 = vld [vmem:[%s504 + $0x38] sm:$0xf]
        %v520 = vld [vmem:[%s504 + $0x3c] sm:$0xf]
        %v521 = vunpack.c.l.bf16 %v505
        %v522 = vunpack.c.l.bf16 %v506
        %v523 = vunpack.c.l.bf16 %v507
        %v524 = vunpack.c.l.bf16 %v508
        %v525 = vunpack.c.l.bf16 %v509
        %v526 = vunpack.c.l.bf16 %v510
        %v527 = vunpack.c.l.bf16 %v511
        %v528 = vunpack.c.l.bf16 %v512
        %v529 = vunpack.c.l.bf16 %v513
        %v530 = vunpack.c.l.bf16 %v514
        %v531 = vunpack.c.l.bf16 %v515
        %v532 = vunpack.c.l.bf16 %v516
        %v533 = vunpack.c.l.bf16 %v517
        %v534 = vunpack.c.l.bf16 %v518
        %v535 = vunpack.c.l.bf16 %v519
        %v536 = vunpack.c.l.bf16 %v520
        %v537 = vld [vmem:[%s303] sm:$0xf]
        %v538 = vld [vmem:[%s303 + $0x4] sm:$0xf]
        %v539 = vld [vmem:[%s303 + $0x8] sm:$0xf]
        %v540 = vld [vmem:[%s303 + $0xc] sm:$0xf]
        %v541 = vld [vmem:[%s303 + $0x10] sm:$0xf]
        %v542 = vld [vmem:[%s303 + $0x14] sm:$0xf]
        %v543 = vld [vmem:[%s303 + $0x18] sm:$0xf]
        %v544 = vld [vmem:[%s303 + $0x1c] sm:$0xf]
        %v545 = vld [vmem:[%s303 + $0x20] sm:$0xf]
        %v546 = vld [vmem:[%s303 + $0x24] sm:$0xf]
        %v547 = vld [vmem:[%s303 + $0x28] sm:$0xf]
        %v548 = vld [vmem:[%s303 + $0x2c] sm:$0xf]
        %v549 = vld [vmem:[%s303 + $0x30] sm:$0xf]
        %v550 = vld [vmem:[%s303 + $0x34] sm:$0xf]
        %v551 = vld [vmem:[%s303 + $0x38] sm:$0xf]
        %v552 = vld [vmem:[%s303 + $0x3c] sm:$0xf]
        %v553 = vunpack.c.l.bf16 %v537
        %v554 = vunpack.c.l.bf16 %v538
        %v555 = vunpack.c.l.bf16 %v539
        %v556 = vunpack.c.l.bf16 %v540
        %v557 = vunpack.c.l.bf16 %v541
        %v558 = vunpack.c.l.bf16 %v542
        %v559 = vunpack.c.l.bf16 %v543
        %v560 = vunpack.c.l.bf16 %v544
        %v561 = vunpack.c.l.bf16 %v545
        %v562 = vunpack.c.l.bf16 %v546
        %v563 = vunpack.c.l.bf16 %v547
        %v564 = vunpack.c.l.bf16 %v548
        %v565 = vunpack.c.l.bf16 %v549
        %v566 = vunpack.c.l.bf16 %v550
        %v567 = vunpack.c.l.bf16 %v551
        %v568 = vunpack.c.l.bf16 %v552
        %s569 = scalar_lea.vmem %s303, 64 [#allocation12]
        %v570 = vld [vmem:[%s569] sm:$0xf]
        %v571 = vld [vmem:[%s569 + $0x4] sm:$0xf]
        %v572 = vld [vmem:[%s569 + $0x8] sm:$0xf]
        %v573 = vld [vmem:[%s569 + $0xc] sm:$0xf]
        %v574 = vld [vmem:[%s569 + $0x10] sm:$0xf]
        %v575 = vld [vmem:[%s569 + $0x14] sm:$0xf]
        %v576 = vld [vmem:[%s569 + $0x18] sm:$0xf]
        %v577 = vld [vmem:[%s569 + $0x1c] sm:$0xf]
        %v578 = vld [vmem:[%s569 + $0x20] sm:$0xf]
        %v579 = vld [vmem:[%s569 + $0x24] sm:$0xf]
        %v580 = vld [vmem:[%s569 + $0x28] sm:$0xf]
        %v581 = vld [vmem:[%s569 + $0x2c] sm:$0xf]
        %v582 = vld [vmem:[%s569 + $0x30] sm:$0xf]
        %v583 = vld [vmem:[%s569 + $0x34] sm:$0xf]
        %v584 = vld [vmem:[%s569 + $0x38] sm:$0xf]
        %v585 = vld [vmem:[%s569 + $0x3c] sm:$0xf]
        %v586 = vunpack.c.l.bf16 %v570
        %v587 = vunpack.c.l.bf16 %v571
        %v588 = vunpack.c.l.bf16 %v572
        %v589 = vunpack.c.l.bf16 %v573
        %v590 = vunpack.c.l.bf16 %v574
        %v591 = vunpack.c.l.bf16 %v575
        %v592 = vunpack.c.l.bf16 %v576
        %v593 = vunpack.c.l.bf16 %v577
        %v594 = vunpack.c.l.bf16 %v578
        %v595 = vunpack.c.l.bf16 %v579
        %v596 = vunpack.c.l.bf16 %v580
        %v597 = vunpack.c.l.bf16 %v581
        %v598 = vunpack.c.l.bf16 %v582
        %v599 = vunpack.c.l.bf16 %v583
        %v600 = vunpack.c.l.bf16 %v584
        %v601 = vunpack.c.l.bf16 %v585
        %v602 = vmul.f32 %v422, %v553
        %v603 = vmul.f32 %v423, %v554
        %v604 = vmul.f32 %v424, %v555
        %v605 = vmul.f32 %v425, %v556
        %v606 = vmul.f32 %v426, %v557
        %v607 = vmul.f32 %v427, %v558
        %v608 = vmul.f32 %v428, %v559
        %v609 = vmul.f32 %v429, %v560
        %v610 = vmul.f32 %v430, %v561
        %v611 = vmul.f32 %v431, %v562
        %v612 = vmul.f32 %v432, %v563
        %v613 = vmul.f32 %v433, %v564
        %v614 = vmul.f32 %v434, %v565
        %v615 = vmul.f32 %v435, %v566
        %v616 = vmul.f32 %v436, %v567
        %v617 = vmul.f32 %v437, %v568
        %v618 = vmul.f32 %v602, %v455
        %v619 = vmul.f32 %v603, %v456
        %v620 = vmul.f32 %v604, %v457
        %v621 = vmul.f32 %v605, %v458
        %v622 = vmul.f32 %v606, %v459
        %v623 = vmul.f32 %v607, %v460
        %v624 = vmul.f32 %v608, %v461
        %v625 = vmul.f32 %v609, %v462
        %v626 = vmul.f32 %v610, %v463
        %v627 = vmul.f32 %v611, %v464
        %v628 = vmul.f32 %v612, %v465
        %v629 = vmul.f32 %v613, %v466
        %v630 = vmul.f32 %v614, %v467
        %v631 = vmul.f32 %v615, %v468
        %v632 = vmul.f32 %v616, %v469
        %v633 = vmul.f32 %v617, %v470
        %634 = vadd.xlane.f32.xlu0 %v618
        %v635 = vpop.xlane.xlu0 %634
        %636 = vadd.xlane.f32.xlu0 %v619
        %v637 = vpop.xlane.xlu0 %636
        %638 = vadd.xlane.f32.xlu0 %v620
        %v639 = vpop.xlane.xlu0 %638
        %640 = vadd.xlane.f32.xlu0 %v621
        %v641 = vpop.xlane.xlu0 %640
        %642 = vadd.xlane.f32.xlu0 %v622
        %v643 = vpop.xlane.xlu0 %642
        %644 = vadd.xlane.f32.xlu0 %v623
        %v645 = vpop.xlane.xlu0 %644
        %646 = vadd.xlane.f32.xlu0 %v624
        %v647 = vpop.xlane.xlu0 %646
        %648 = vadd.xlane.f32.xlu0 %v625
        %v649 = vpop.xlane.xlu0 %648
        %650 = vadd.xlane.f32.xlu0 %v626
        %v651 = vpop.xlane.xlu0 %650
        %652 = vadd.xlane.f32.xlu0 %v627
        %v653 = vpop.xlane.xlu0 %652
        %654 = vadd.xlane.f32.xlu0 %v628
        %v655 = vpop.xlane.xlu0 %654
        %656 = vadd.xlane.f32.xlu0 %v629
        %v657 = vpop.xlane.xlu0 %656
        %658 = vadd.xlane.f32.xlu0 %v630
        %v659 = vpop.xlane.xlu0 %658
        %660 = vadd.xlane.f32.xlu0 %v631
        %v661 = vpop.xlane.xlu0 %660
        %662 = vadd.xlane.f32.xlu0 %v632
        %v663 = vpop.xlane.xlu0 %662
        %664 = vadd.xlane.f32.xlu0 %v633
        %v665 = vpop.xlane.xlu0 %664
        %v666 = vmul.f32 %v488, %v586
        %v667 = vmul.f32 %v489, %v587
        %v668 = vmul.f32 %v490, %v588
        %v669 = vmul.f32 %v491, %v589
        %v670 = vmul.f32 %v492, %v590
        %v671 = vmul.f32 %v493, %v591
        %v672 = vmul.f32 %v494, %v592
        %v673 = vmul.f32 %v495, %v593
        %v674 = vmul.f32 %v496, %v594
        %v675 = vmul.f32 %v497, %v595
        %v676 = vmul.f32 %v498, %v596
        %v677 = vmul.f32 %v499, %v597
        %v678 = vmul.f32 %v500, %v598
        %v679 = vmul.f32 %v501, %v599
        %v680 = vmul.f32 %v502, %v600
        %v681 = vmul.f32 %v503, %v601
        %v682 = vmul.f32 %v666, %v521
        %v683 = vmul.f32 %v667, %v522
        %v684 = vmul.f32 %v668, %v523
        %v685 = vmul.f32 %v669, %v524
        %v686 = vmul.f32 %v670, %v525
        %v687 = vmul.f32 %v671, %v526
        %v688 = vmul.f32 %v672, %v527
        %v689 = vmul.f32 %v673, %v528
        %v690 = vmul.f32 %v674, %v529
        %v691 = vmul.f32 %v675, %v530
        %v692 = vmul.f32 %v676, %v531
        %v693 = vmul.f32 %v677, %v532
        %v694 = vmul.f32 %v678, %v533
        %v695 = vmul.f32 %v679, %v534
        %v696 = vmul.f32 %v680, %v535
        %v697 = vmul.f32 %v681, %v536
        %698 = vadd.xlane.f32.xlu0 %v682
        %v699 = vpop.xlane.xlu0 %698
        %700 = vadd.xlane.f32.xlu0 %v683
        %v701 = vpop.xlane.xlu0 %700
        %702 = vadd.xlane.f32.xlu0 %v684
        %v703 = vpop.xlane.xlu0 %702
        %704 = vadd.xlane.f32.xlu0 %v685
        %v705 = vpop.xlane.xlu0 %704
        %706 = vadd.xlane.f32.xlu0 %v686
        %v707 = vpop.xlane.xlu0 %706
        %708 = vadd.xlane.f32.xlu0 %v687
        %v709 = vpop.xlane.xlu0 %708
        %710 = vadd.xlane.f32.xlu0 %v688
        %v711 = vpop.xlane.xlu0 %710
        %712 = vadd.xlane.f32.xlu0 %v689
        %v713 = vpop.xlane.xlu0 %712
        %714 = vadd.xlane.f32.xlu0 %v690
        %v715 = vpop.xlane.xlu0 %714
        %716 = vadd.xlane.f32.xlu0 %v691
        %v717 = vpop.xlane.xlu0 %716
        %718 = vadd.xlane.f32.xlu0 %v692
        %v719 = vpop.xlane.xlu0 %718
        %720 = vadd.xlane.f32.xlu0 %v693
        %v721 = vpop.xlane.xlu0 %720
        %722 = vadd.xlane.f32.xlu0 %v694
        %v723 = vpop.xlane.xlu0 %722
        %724 = vadd.xlane.f32.xlu0 %v695
        %v725 = vpop.xlane.xlu0 %724
        %726 = vadd.xlane.f32.xlu0 %v696
        %v727 = vpop.xlane.xlu0 %726
        %728 = vadd.xlane.f32.xlu0 %v697
        %v729 = vpop.xlane.xlu0 %728
        %v730 = vsub.f32 %v635, %v699
        %v731 = vsub.f32 %v637, %v701
        %v732 = vsub.f32 %v639, %v703
        %v733 = vsub.f32 %v641, %v705
        %v734 = vsub.f32 %v643, %v707
        %v735 = vsub.f32 %v645, %v709
        %v736 = vsub.f32 %v647, %v711
        %v737 = vsub.f32 %v649, %v713
        %v738 = vsub.f32 %v651, %v715
        %v739 = vsub.f32 %v653, %v717
        %v740 = vsub.f32 %v655, %v719
        %v741 = vsub.f32 %v657, %v721
        %v742 = vsub.f32 %v659, %v723
        %v743 = vsub.f32 %v661, %v725
        %v744 = vsub.f32 %v663, %v727
        %v745 = vsub.f32 %v665, %v729
        %v746 = vsub.f32 1.0, %v730
        %v747 = vsub.f32 1.0, %v731
        %v748 = vsub.f32 1.0, %v732
        %v749 = vsub.f32 1.0, %v733
        %v750 = vsub.f32 1.0, %v734
        %v751 = vsub.f32 1.0, %v735
        %v752 = vsub.f32 1.0, %v736
        %v753 = vsub.f32 1.0, %v737
        %v754 = vsub.f32 1.0, %v738
        %v755 = vsub.f32 1.0, %v739
        %v756 = vsub.f32 1.0, %v740
        %v757 = vsub.f32 1.0, %v741
        %v758 = vsub.f32 1.0, %v742
        %v759 = vsub.f32 1.0, %v743
        %v760 = vsub.f32 1.0, %v744
        %v761 = vsub.f32 1.0, %v745
        %v762 = vmax.f32 %v746, 0.0
        %v763 = vmax.f32 %v747, 0.0
        %v764 = vmax.f32 %v748, 0.0
        %v765 = vmax.f32 %v749, 0.0
        %v766 = vmax.f32 %v750, 0.0
        %v767 = vmax.f32 %v751, 0.0
        %v768 = vmax.f32 %v752, 0.0
        %v769 = vmax.f32 %v753, 0.0
        %v770 = vmax.f32 %v754, 0.0
        %v771 = vmax.f32 %v755, 0.0
        %v772 = vmax.f32 %v756, 0.0
        %v773 = vmax.f32 %v757, 0.0
        %v774 = vmax.f32 %v758, 0.0
        %v775 = vmax.f32 %v759, 0.0
        %v776 = vmax.f32 %v760, 0.0
        %v777 = vmax.f32 %v761, 0.0
        %v778 = vlaneseq
        %v779 = vshrl.u32 %v778, 7
        %v780 = vadd.s32 %v779, 8
        %v781 = vadd.s32 %v779, 16
        %v782 = vadd.s32 %v779, 24
        %v783 = vadd.s32 %v779, 32
        %v784 = vadd.s32 %v779, 40
        %v785 = vadd.s32 %v779, 48
        %v786 = vadd.s32 %v779, 56
        %v787 = vadd.s32 %v779, 64
        %v788 = vadd.s32 %v779, 72
        %v789 = vadd.s32 %v779, 80
        %v790 = vadd.s32 %v779, 88
        %v791 = vadd.s32 %v779, 96
        %v792 = vadd.s32 %v779, 104
        %v793 = vadd.s32 %v779, 112
        %v794 = vadd.s32 %v779, 120
        %v795 = vadd.s32 %v779, %v355
        %v796 = vadd.s32 %v780, %v355
        %v797 = vadd.s32 %v781, %v355
        %v798 = vadd.s32 %v782, %v355
        %v799 = vadd.s32 %v783, %v355
        %v800 = vadd.s32 %v784, %v355
        %v801 = vadd.s32 %v785, %v355
        %v802 = vadd.s32 %v786, %v355
        %v803 = vadd.s32 %v787, %v355
        %v804 = vadd.s32 %v788, %v355
        %v805 = vadd.s32 %v789, %v355
        %v806 = vadd.s32 %v790, %v355
        %v807 = vadd.s32 %v791, %v355
        %v808 = vadd.s32 %v792, %v355
        %v809 = vadd.s32 %v793, %v355
        %v810 = vadd.s32 %v794, %v355
        %vm811 = vcmp.lt.s32.totalorder %v795, %v357
        %vm812 = vcmp.lt.s32.totalorder %v796, %v357
        %vm813 = vcmp.lt.s32.totalorder %v797, %v357
        %vm814 = vcmp.lt.s32.totalorder %v798, %v357
        %vm815 = vcmp.lt.s32.totalorder %v799, %v357
        %vm816 = vcmp.lt.s32.totalorder %v800, %v357
        %vm817 = vcmp.lt.s32.totalorder %v801, %v357
        %vm818 = vcmp.lt.s32.totalorder %v802, %v357
        %vm819 = vcmp.lt.s32.totalorder %v803, %v357
        %vm820 = vcmp.lt.s32.totalorder %v804, %v357
        %vm821 = vcmp.lt.s32.totalorder %v805, %v357
        %vm822 = vcmp.lt.s32.totalorder %v806, %v357
        %vm823 = vcmp.lt.s32.totalorder %v807, %v357
        %vm824 = vcmp.lt.s32.totalorder %v808, %v357
        %vm825 = vcmp.lt.s32.totalorder %v809, %v357
        %vm826 = vcmp.lt.s32.totalorder %v810, %v357
        %v827 = vsel %vm811, 1, 0
        %v828 = vsel %vm812, 1, 0
        %v829 = vsel %vm813, 1, 0
        %v830 = vsel %vm814, 1, 0
        %v831 = vsel %vm815, 1, 0
        %v832 = vsel %vm816, 1, 0
        %v833 = vsel %vm817, 1, 0
        %v834 = vsel %vm818, 1, 0
        %v835 = vsel %vm819, 1, 0
        %v836 = vsel %vm820, 1, 0
        %v837 = vsel %vm821, 1, 0
        %v838 = vsel %vm822, 1, 0
        %v839 = vsel %vm823, 1, 0
        %v840 = vsel %vm824, 1, 0
        %v841 = vsel %vm825, 1, 0
        %v842 = vsel %vm826, 1, 0
        %v843 = vcvt.s32.f32 %v827
        %v844 = vcvt.s32.f32 %v828
        %v845 = vcvt.s32.f32 %v829
        %v846 = vcvt.s32.f32 %v830
        %v847 = vcvt.s32.f32 %v831
        %v848 = vcvt.s32.f32 %v832
        %v849 = vcvt.s32.f32 %v833
        %v850 = vcvt.s32.f32 %v834
        %v851 = vcvt.s32.f32 %v835
        %v852 = vcvt.s32.f32 %v836
        %v853 = vcvt.s32.f32 %v837
        %v854 = vcvt.s32.f32 %v838
        %v855 = vcvt.s32.f32 %v839
        %v856 = vcvt.s32.f32 %v840
        %v857 = vcvt.s32.f32 %v841
        %v858 = vcvt.s32.f32 %v842
        %v859 = vld [vmem:[#allocation4] sm:$0x1]
        %v860 = vmul.f32 %v843, %v762
        %v861 = vmul.f32 %v844, %v763
        %v862 = vmul.f32 %v845, %v764
        %v863 = vmul.f32 %v846, %v765
        %v864 = vmul.f32 %v847, %v766
        %v865 = vmul.f32 %v848, %v767
        %v866 = vmul.f32 %v849, %v768
        %v867 = vmul.f32 %v850, %v769
        %v868 = vmul.f32 %v851, %v770
        %v869 = vmul.f32 %v852, %v771
        %v870 = vmul.f32 %v853, %v772
        %v871 = vmul.f32 %v854, %v773
        %v872 = vmul.f32 %v855, %v774
        %v873 = vmul.f32 %v856, %v775
        %v874 = vmul.f32 %v857, %v776
        %v875 = vmul.f32 %v858, %v777
        %vm876 = vcmask 7168
        %v877 = vsel %vm876, %v860, 0.0
        %v878 = vsel %vm876, %v861, 0.0
        %v879 = vadd.f32 %v877, %v878
        %v880 = vsel %vm876, %v862, 0.0
        %v881 = vadd.f32 %v879, %v880
        %v882 = vsel %vm876, %v863, 0.0
        %v883 = vadd.f32 %v881, %v882
        %v884 = vsel %vm876, %v864, 0.0
        %v885 = vadd.f32 %v883, %v884
        %v886 = vsel %vm876, %v865, 0.0
        %v887 = vadd.f32 %v885, %v886
        %v888 = vsel %vm876, %v866, 0.0
        %v889 = vadd.f32 %v887, %v888
        %v890 = vsel %vm876, %v867, 0.0
        %v891 = vadd.f32 %v889, %v890
        %v892 = vsel %vm876, %v868, 0.0
        %v893 = vadd.f32 %v891, %v892
        %v894 = vsel %vm876, %v869, 0.0
        %v895 = vadd.f32 %v893, %v894
        %v896 = vsel %vm876, %v870, 0.0
        %v897 = vadd.f32 %v895, %v896
        %v898 = vsel %vm876, %v871, 0.0
        %v899 = vadd.f32 %v897, %v898
        %v900 = vsel %vm876, %v872, 0.0
        %v901 = vadd.f32 %v899, %v900
        %v902 = vsel %vm876, %v873, 0.0
        %v903 = vadd.f32 %v901, %v902
        %v904 = vsel %vm876, %v874, 0.0
        %v905 = vadd.f32 %v903, %v904
        %v906 = vsel %vm876, %v875, 0.0
        %v907 = vadd.f32 %v905, %v906
        %908 = vadd.xlane.f32.xlu0 %v907
        %v909 = vpop.xlane.xlu0 %908
        %v910 = vrot.slane %v909, 4
        %v911 = vadd.f32 %v909, %v910
        %v912 = vrot.slane %v911, 2
        %v913 = vadd.f32 %v911, %v912
        %v914 = vrot.slane %v913, 1
        %v915 = vadd.f32 %v913, %v914
        %s916 = vtos %v915
        %v917 = vstv %s916
        %v918 = vadd.f32 %v859, %v917
        %vm919 = vcmask 0
        %920 = vst.msk [vmem:[#allocation4] sm:$0x1] %vm919, %v918
        // Predicated region
        $region49: #{tpu_custom_call.1} parent=31 // pred_check
          %p921 = pneg %p344
        $region50: #{tpu_custom_call.1} parent=31 // pred_check_branch
          %923 = sbr.rel (%p921) target = $region52
        $region51: #{tpu_custom_call.1} parent=31 // pred_region
          %s924 = scvt.s32.f32 %s343
          %v925 = vstv %s924
          %v926 = vrcp.pop %v925
          %s927 = vtos %v926
          %v928 = vld [vmem:[#allocation2] sm:$0x1]
          %vm929 = vcmask 1040384
          %v930 = vsel %vm929, %v928, 0.0
          %931 = vadd.xlane.f32.xlu0 %v930
          %v932 = vpop.xlane.xlu0 %931
          %v933 = vrot.slane %v932, 4
          %v934 = vadd.f32 %v932, %v933
          %v935 = vrot.slane %v934, 2
          %v936 = vadd.f32 %v934, %v935
          %v937 = vrot.slane %v936, 1
          %v938 = vadd.f32 %v936, %v937
          %s939 = vtos %v938
          %v940 = vld [vmem:[#allocation4] sm:$0x1]
          %s941 = vtos %v940
          %s942 = sadd.f32 %s939, %s941
          %v943 = vld [vmem:[#allocation3] sm:$0x3]
          %vm944 = vcmask 1041408
          %v945 = vsel %vm944, %v943, 0.0
          %946 = vadd.xlane.f32.xlu0 %v945
          %v947 = vpop.xlane.xlu0 %946
          %v948 = vrot.slane %v947, 4
          %v949 = vadd.f32 %v947, %v948
          %v950 = vrot.slane %v949, 2
          %v951 = vadd.f32 %v949, %v950
          %v952 = vrot.slane %v951, 1
          %v953 = vadd.f32 %v951, %v952
          %s954 = vtos %v953
          %s955 = smul.f32 %s954, 0.5
          %s956 = sadd.f32 %s942, %s955
          %s957 = smul.f32 %s956, %s927
          %v958 = vstv %s957
          %959 = vst [vmem:[%s335] sm:$0xff] %v958
        $region52: #{tpu_custom_call.1} parent=31 // pred_fallthru
          _
        %s960 = sand.u32 %s129, 1
        %s961 = scalar_lea.sflag [#allocation9], %s960
        %s962 = sand.u32 %s129, 1
        %s963 = smul.addr %s962, 8
        %s964 = scalar_lea.vmem [#allocation13], %s963
        // Predicated region
        $region53: #{tpu_custom_call.1} parent=31 // pred_check
          %p965 = pneg %p139
        $region54: #{tpu_custom_call.1} parent=31 // pred_check_branch
          %967 = sbr.rel (%p965) target = $region56
        $region55: #{tpu_custom_call.1} parent=31 // pred_region
          %s969 = ssub.s32 128, 128
          %970 = vsyncadd %s961, %s969
          %s971 = smul.addr %s29, 128
          %s972 = scalar_lea.hbm %s4, %s971
          %s974 = sshll.u32 %s964, 4
          %s975 = int_to_ptr.vmem [resolvable:$true] %s974
          %977 = dma.vmem_to_hbm [thread:$0]  %s975, 128, %s972, %s961
        $region56: #{tpu_custom_call.1} parent=31 // pred_fallthru
          _
      $region32: #{tpu_custom_call.1} parent=5 // pred_fallthru
        _
      %p978 = scmp.le.s32.totalorder 2, %s20
      // Predicated region
      $region57: #{tpu_custom_call.1} parent=5 // pred_check
        %p979 = pneg %p978
      $region58: #{tpu_custom_call.1} parent=5 // pred_check_branch
        %981 = sbr.rel (%p979) target = $region60
      $region59: #{tpu_custom_call.1} parent=5 // pred_region
        %s982 = ssub.s32 %s20, 2
        // Predicated region
        $region61: #{tpu_custom_call.1} parent=59 // pred_check
          %p983 = pneg %p145
        $region62: #{tpu_custom_call.1} parent=59 // pred_check_branch
          %985 = sbr.rel (%p983) target = $region64
        $region63: #{tpu_custom_call.1} parent=59 // pred_region
          %s986 = sand.u32 %s130, 1
          %s987 = scalar_lea.sflag [#allocation9], %s986
          %s988 = sand.u32 %s130, 1
          %s989 = smul.addr %s988, 8
          %s990 = scalar_lea.vmem [#allocation13], %s989
          %991 = dma.done %s987, 128
        $region64: #{tpu_custom_call.1} parent=59 // pred_fallthru
          _
      $region60: #{tpu_custom_call.1} parent=5 // pred_fallthru
        _
    $region6: #{tpu_custom_call.1} parent=1 // loop_footer
      %s24 = sadd.s32 1, %s20
    $region7: #{tpu_custom_call.1} parent=1 // loop_footer_branch
      %19 = sbr.rel target = $region3
    $region8: #{tpu_custom_call.1} parent=1 // loop_exit
      _
    %992 = vsyncpa [#allocation8], 1
    %s993 = scalar_lea.sflag [#allocation8], 1
    %994 = vsyncpa %s993, 1
    %995 = vsyncpa [#allocation11], 1
    %s996 = scalar_lea.sflag [#allocation11], 1
    %997 = vsyncpa %s996, 1
    %998 = vsyncpa [#allocation9], 1
    %s999 = scalar_lea.sflag [#allocation9], 1
    %1000 = vsyncpa %s999, 1

</llo_original>
